<compile_context>
chip_gen: v7x
topology: tpu7x:2x2x1
jax: 0.10.0
libtpu: 0.0.40
codegen_flags: <defaults>
</compile_context>

<pallas_src>
import jax
import jax.numpy as jnp
from jax.experimental import pallas as pl
from jax.experimental.pallas import tpu as pltpu


# ----------------------------------------------------------------------------
# Kernels
# ----------------------------------------------------------------------------
def _dense_kernel(x_ref, wt_ref, b_ref, o_ref):
    # x_ref: [TM, H_in]; wt_ref: [H_in, H_out] (pre-transposed weight);
    # b_ref: [1, H_out]; o_ref: [TM, H_out]
    y = jnp.dot(x_ref[...], wt_ref[...], preferred_element_type=jnp.float32)
    y = y + b_ref[...].astype(jnp.float32)
    # Dropout: inference mode -> identity.
    o_ref[...] = y.astype(o_ref.dtype)


def _dense_residual_kernel(x_ref, wt_ref, b_ref, r_ref, o_ref):
    # Same as above + fused residual add (r_ref: [TM, H_out]).
    y = jnp.dot(x_ref[...], wt_ref[...], preferred_element_type=jnp.float32)
    y = y + b_ref[...].astype(jnp.float32)
    y = y + r_ref[...].astype(jnp.float32)
    o_ref[...] = y.astype(o_ref.dtype)


# ----------------------------------------------------------------------------
# Chip profile / tiling
# ----------------------------------------------------------------------------
def _chip_profile():
    """(vmem_limit_bytes, vmem_budget_bytes, tm_cap, use_core_parallel)."""
    kind = ""
    try:
        kind = jax.devices()[0].device_kind.lower()
    except Exception:  # pragma: no cover - defensive (e.g. interpret mode)
        pass
    if "7" in kind:
        # v7x: 64 MiB VMEM per TensorCore, 2 TCs/chip -> conservative budget,
        # split the M grid axis across both cores.
        return 32 * 1024 * 1024, 24 * 1024 * 1024, 1024, True
    # v5e / v6e (and older): 128 MiB physical VMEM, single TensorCore.
    return 64 * 1024 * 1024, 48 * 1024 * 1024, 2048, False


def _pick_tile_m(M, H, x_bytes, o_bytes, w_bytes, r_bytes, vmem_budget_bytes,
                 tm_cap):
    """Largest M tile whose VMEM footprint fits the budget."""
    # Resident weight + bias. The auto-pipeline double-buffers them even though
    # their index_map is constant, so count 2x (conservative).
    weight_cost = 2 * (H * H * w_bytes + H * 4)
    # Per activation row: double-buffered x tile + out tile (+ residual tile
    # when fused) + the f32 accumulator intermediate (dot result + bias add)
    # that lives in VMEM before the cast/store.
    per_row = 2 * H * (x_bytes + o_bytes + r_bytes) + 4 * H
    tm = (vmem_budget_bytes - weight_cost) // per_row
    tm = int(max(8, min(tm, tm_cap)))
    if tm >= M:
        return M            # full extent -> always a legal block shape
    return max(8, (tm // 8) * 8)   # multiple of 8 (sublane) when tiling


# ----------------------------------------------------------------------------
# Wrapper
# ----------------------------------------------------------------------------
def vit_self_output(hidden_states, input_tensor, weight, bias, *,
                    fuse_residual=False):
    """ViTSelfOutput forward.

    hidden_states: [B, S, H]; weight: [H, H] (PyTorch nn.Linear layout,
    out_features x in_features); bias: [H]. Returns [B, S, H].

    By default `input_tensor` is unused, matching the PyTorch module (the
    residual connection is defined in ViTLayer). Set fuse_residual=True to
    fold that residual add into the kernel and skip the extra HBM round trip.
    """
    B, S, H = hidden_states.shape
    M = B * S
    x2d = hidden_states.reshape(M, H)
    b2d = bias.reshape(1, H)
    # One-time transpose so the kernel feeds the MXU the canonical layout
    # (contract lhs last dim with rhs first dim). Constant-folded for
    # inference weights.
    wt = weight.T  # [H_in, H_out]

    vmem_limit, vmem_budget, tm_cap, core_parallel = _chip_profile()

    x_bytes = x2d.dtype.itemsize
    w_bytes = wt.dtype.itemsize
    o_bytes = x_bytes
    r_bytes = input_tensor.dtype.itemsize if fuse_residual else 0

    tm = _pick_tile_m(M, H, x_bytes, o_bytes, w_bytes, r_bytes, vmem_budget,
                      tm_cap)
    grid_m = pl.cdiv(M, tm)

    in_specs = [
        pl.BlockSpec((tm, H), lambda i: (i, 0)),   # activations: tiled over M
        pl.BlockSpec((H, H), lambda i: (0, 0)),    # weight^T: resident
        pl.BlockSpec((1, H), lambda i: (0, 0)),    # bias: resident
    ]
    operands = [x2d, wt, b2d]
    kernel = _dense_kernel
    bytes_accessed = (M * H * x_bytes + H * H * w_bytes
                      + H * bias.dtype.itemsize + M * H * o_bytes)
    if fuse_residual:
        in_specs.append(pl.BlockSpec((tm, H), lambda i: (i, 0)))
        operands.append(input_tensor.reshape(M, H))
        kernel = _dense_residual_kernel
        bytes_accessed += M * H * r_bytes

    cost = pl.CostEstimate(
        flops=2 * M * H * H,
        transcendentals=0,
        bytes_accessed=bytes_accessed,
    )

    semantics = (pltpu.CORE_PARALLEL,) if core_parallel else ("parallel",)

    out = pl.pallas_call(
        kernel,
        out_shape=jax.ShapeDtypeStruct((M, H), hidden_states.dtype),
        grid_spec=pltpu.PrefetchScalarGridSpec(
            num_scalar_prefetch=0,
            grid=(grid_m,),
            in_specs=in_specs,
            out_specs=pl.BlockSpec((tm, H), lambda i: (i, 0)),
        ),
        compiler_params=pltpu.CompilerParams(
            dimension_semantics=semantics,
            vmem_limit_bytes=vmem_limit,
        ),
        cost_estimate=cost,
    )(*operands)
    return out.reshape(B, S, H)


# ----------------------------------------------------------------------------
# Demo / correctness check
# ----------------------------------------------------------------------------
if __name__ == "__main__":
    # Small shapes consistent with ViT: batch=2, seq=8, hidden=32.
    # (Real deployment should use H that is a multiple of 128, e.g. 768/1024,
    # so last-dim blocks are lane-dense; H=32 is only a correctness demo.)
    B, S, H = 2, 8, 32
    key = jax.random.PRNGKey(0)
    k1, k2, k3, k4 = jax.random.split(key, 4)

    hidden_states = jax.random.normal(k1, (B, S, H), dtype=jnp.float32)
    input_tensor = jax.random.normal(k2, (B, S, H), dtype=jnp.float32)

    # Deterministic parameter init (nn.Linear: weight [out, in], bias [out]).
    bound = 1.0 / (H ** 0.5)
    weight = jax.random.uniform(k3, (H, H), minval=-bound, maxval=bound,
                                dtype=jnp.float32)
    bias = jax.random.uniform(k4, (H,), minval=-bound, maxval=bound,
                              dtype=jnp.float32)

    # Reference in plain JAX (f32).
    ref = (hidden_states.reshape(-1, H) @ weight.T + bias).reshape(B, S, H)

    # f32 path (matches PyTorch f32 semantics).
    out = vit_self_output(hidden_states, input_tensor, weight, bias)
    out = jax.block_until_ready(out)
    assert jnp.allclose(out, ref, atol=1e-5, rtol=1e-5), "f32 mismatch vs reference"

    # Optional fused-residual path (what ViTLayer would otherwise do in a
    # separate XLA op) — checked against ref + input_tensor.
    out_res = vit_self_output(hidden_states, input_tensor, weight, bias,
                              fuse_residual=True)
    out_res = jax.block_until_ready(out_res)
    assert jnp.allclose(out_res, ref + input_tensor, atol=1e-5, rtol=1e-5), \
        "fused-residual mismatch vs reference"

    # bf16 deployment path: bf16 activations/weight, bias kept in f32 (kernel
    # upcasts before the add), f32 MXU accumulation inside the kernel.
    out_bf16 = vit_self_output(hidden_states.astype(jnp.bfloat16), input_tensor,
                               weight.astype(jnp.bfloat16), bias)
    out_bf16 = jax.block_until_ready(out_bf16)
    assert jnp.allclose(out_bf16.astype(jnp.float32), ref,
                        atol=5e-2, rtol=5e-2), "bf16 mismatch vs reference"

    print("KERNEL_OK")
</pallas_src>

<mosaic_0001>
module attributes {stable_mosaic.version = 11 : i64} {
  func.func @_dense_kernel(%arg0: i32, %arg1: memref<16x32xf32, #tpu.memory_space<vmem>>, %arg2: memref<32x32xf32, #tpu.memory_space<vmem>>, %arg3: memref<1x32xf32, #tpu.memory_space<vmem>>, %arg4: memref<16x32xf32, #tpu.memory_space<vmem>>) attributes {dimension_semantics = [#tpu.dimension_semantics<parallel>], iteration_bounds = array<i64: 1>, scalar_prefetch = 0 : i64, scratch_operands = 0 : i64, tpu.core_type = #tpu.core_type<tc>, window_params = [{transform_indices = @transform_0, window_bounds = array<i64: 16, 32>}, {pipeline_mode = #tpu.pipeline_mode<synchronous>, transform_indices = @transform_1, window_bounds = array<i64: 32, 32>}, {pipeline_mode = #tpu.pipeline_mode<synchronous>, transform_indices = @transform_2, window_bounds = array<i64: 1, 32>}, {transform_indices = @transform_3, window_bounds = array<i64: 16, 32>}]} {
    %c0 = arith.constant 0 : index
    %c0_0 = arith.constant 0 : index
    %0 = vector.load %arg1[%c0, %c0_0] : memref<16x32xf32, #tpu.memory_space<vmem>>, vector<16x32xf32>
    %c0_1 = arith.constant 0 : index
    %c0_2 = arith.constant 0 : index
    %1 = vector.load %arg2[%c0_1, %c0_2] : memref<32x32xf32, #tpu.memory_space<vmem>>, vector<32x32xf32>
    %cst = arith.constant dense<0.000000e+00> : vector<16x32xf32>
    %2 = tpu.matmul %0, %1, %cst {dimension_numbers = #tpu.dot_dimension_numbers<[1], [0], [0], [1], [0, 0, 1, 1], [], []>} : vector<16x32xf32>, vector<32x32xf32>, vector<16x32xf32> -> vector<16x32xf32>
    %c0_3 = arith.constant 0 : index
    %c0_4 = arith.constant 0 : index
    %3 = vector.load %arg3[%c0_3, %c0_4] : memref<1x32xf32, #tpu.memory_space<vmem>>, vector<1x32xf32>
    %4 = vector.broadcast %3 : vector<1x32xf32> to vector<16x32xf32>
    %5 = arith.addf %2, %4 : vector<16x32xf32>
    %c0_5 = arith.constant 0 : index
    %c0_6 = arith.constant 0 : index
    %6 = vector.load %arg4[%c0_5, %c0_6] : memref<16x32xf32, #tpu.memory_space<vmem>>, vector<16x32xf32>
    tpu.vector_store %arg4[%c0_5, %c0_6], %5 {strides = array<i32>} : memref<16x32xf32, #tpu.memory_space<vmem>>, vector<16x32xf32>,
    return
  }
  func.func @transform_0(%arg0: i32) -> (i32, i32) {
    %c0_i32 = arith.constant 0 : i32
    %c0_i32_0 = arith.constant 0 : i32
    return %arg0, %c0_i32 : i32, i32
  }
  func.func @transform_1(%arg0: i32) -> (i32, i32) {
    %c0_i32 = arith.constant 0 : i32
    %c0_i32_0 = arith.constant 0 : i32
    %c0_i32_1 = arith.constant 0 : i32
    return %c0_i32, %c0_i32_0 : i32, i32
  }
  func.func @transform_2(%arg0: i32) -> (i32, i32) {
    %c0_i32 = arith.constant 0 : i32
    %c0_i32_0 = arith.constant 0 : i32
    %c0_i32_1 = arith.constant 0 : i32
    return %c0_i32, %c0_i32_0 : i32, i32
  }
  func.func @transform_3(%arg0: i32) -> (i32, i32) {
    %c0_i32 = arith.constant 0 : i32
    %c0_i32_0 = arith.constant 0 : i32
    return %arg0, %c0_i32 : i32, i32
  }
}

</mosaic_0001>

<llo_original>
// kernel: tpu_custom_call.1
$region0: #{tpu_custom_call.1}
  #allocation0 [shape = 'u32[]', space=smem, size = 0x4, offset = 0x4, fixed_abs, tag = 'smem constant byte address 0x4 - core index']
  #allocation1 [shape = 'u32[144,128]{1,0:T(1,128)}', space=vmem, size = 0x12000, scoped, tag = 'internal scratch']
  %s0 = inlined_call_operand.hbm [shape: f32[16,32], index: 0, kind: input, shape index: {}]
  %s1 = inlined_call_operand.hbm [shape: f32[32,32], index: 1, kind: input, shape index: {}]
  %s2 = inlined_call_operand.hbm [shape: f32[1,32], index: 2, kind: input, shape index: {}]
  %s3 = inlined_call_operand.hbm [shape: f32[16,32], index: 3, kind: output, shape index: {}]
  %s4 = sld [smem:[#allocation0]]
  $region34: #{tpu_custom_call.1} parent=0
    _
  %s6 = ssub.s32 1, %s4
  %s7 = scalar_select 0, %s6, %s4
  $region1: #{tpu_custom_call.1} parent=0
    #allocation2 [shape = 'u8[8192]{0}', space=vmem, size = 0x2000, scoped, tag = 'input window, operand 0, single buffered']
    #allocation3 [shape = 's32[1]{0}', space=sflag, size = 0x4, scoped, tag = 'scoped memory for tpu_custom_call.1']
    #allocation4 [shape = 's32[1]{0}', space=sflag, size = 0x4, scoped, tag = 'scoped memory for tpu_custom_call.1']
    #allocation5 [shape = 'u8[16384]{0}', space=vmem, size = 0x4000, scoped, tag = 'input window, operand 1, single buffered']
    #allocation6 [shape = 's32[1]{0}', space=sflag, size = 0x4, scoped, tag = 'scoped memory for tpu_custom_call.1']
    #allocation7 [shape = 'u8[512]{0}', space=vmem, size = 0x400, scoped, tag = 'input window, operand 2, single buffered']
    #allocation8 [shape = 'u8[8192]{0}', space=vmem, size = 0x2000, scoped, tag = 'output window, operand 0, single buffered']
    %8 = vsyncpa [#allocation3], 0
    %9 = vsyncpa [#allocation6], 0
    %10 = vsyncpa [#allocation4], 0
    // Predicated region
    $region2: #{tpu_custom_call.1} parent=1 // pred_check
      _
    $region3: #{tpu_custom_call.1} parent=1 // pred_check_branch
      %12 = sbr.rel (0) target = $region5
    $region4: #{tpu_custom_call.1} parent=1 // pred_region
      %s14 = ssub.s32 256, 256
      %15 = vsyncadd [#allocation3], %s14
      %s16 = sshll.u32 [#allocation2], 4
      %s17 = int_to_ptr.vmem [resolvable:$true] %s16
      %22 = dma.hbm_to_vmem [thread:$0]  %s0, 256, %s17, [#allocation3], 128, 128, 8
    $region5: #{tpu_custom_call.1} parent=1 // pred_fallthru
      _
    // Predicated region
    $region6: #{tpu_custom_call.1} parent=1 // pred_check
      _
    $region7: #{tpu_custom_call.1} parent=1 // pred_check_branch
      %24 = sbr.rel (0) target = $region9
    $region8: #{tpu_custom_call.1} parent=1 // pred_region
      %s26 = ssub.s32 512, 512
      %27 = vsyncadd [#allocation6], %s26
      %s28 = sshll.u32 [#allocation5], 4
      %s29 = int_to_ptr.vmem [resolvable:$true] %s28
      %34 = dma.hbm_to_vmem [thread:$0]  %s1, 512, %s29, [#allocation6], 128, 128, 8
    $region9: #{tpu_custom_call.1} parent=1 // pred_fallthru
      _
    // Predicated region
    $region10: #{tpu_custom_call.1} parent=1 // pred_check
      _
    $region11: #{tpu_custom_call.1} parent=1 // pred_check_branch
      %36 = sbr.rel (0) target = $region13
    $region12: #{tpu_custom_call.1} parent=1 // pred_region
      %s38 = ssub.s32 16, 16
      %39 = vsyncadd [#allocation6], %s38
      %s41 = sshll.u32 [#allocation7], 4
      %s42 = int_to_ptr.vmem [resolvable:$true] %s41
      %44 = dma.hbm_to_vmem [thread:$0]  %s2, 16, %s42, [#allocation6]
    $region13: #{tpu_custom_call.1} parent=1 // pred_fallthru
      _
    // Predicated region
    $region14: #{tpu_custom_call.1} parent=1 // pred_check
      _
    $region15: #{tpu_custom_call.1} parent=1 // pred_check_branch
      %46 = sbr.rel (0) target = $region17
    $region16: #{tpu_custom_call.1} parent=1 // pred_region
      %47 = dma.done [#allocation3], 256
    $region17: #{tpu_custom_call.1} parent=1 // pred_fallthru
      _
    // Predicated region
    $region18: #{tpu_custom_call.1} parent=1 // pred_check
      _
    $region19: #{tpu_custom_call.1} parent=1 // pred_check_branch
      %49 = sbr.rel (0) target = $region21
    $region20: #{tpu_custom_call.1} parent=1 // pred_region
      %50 = dma.done [#allocation6], 512
    $region21: #{tpu_custom_call.1} parent=1 // pred_fallthru
      _
    // Predicated region
    $region22: #{tpu_custom_call.1} parent=1 // pred_check
      _
    $region23: #{tpu_custom_call.1} parent=1 // pred_check_branch
      %52 = sbr.rel (0) target = $region25
    $region24: #{tpu_custom_call.1} parent=1 // pred_region
      %53 = dma.done [#allocation6], 16
    $region25: #{tpu_custom_call.1} parent=1 // pred_fallthru
      _
    %v54 = vld [vmem:[#allocation2] sm:$0xff]
    %v55 = vld [vmem:[#allocation2 + $0x8] sm:$0xff]
    %v56 = vld [vmem:[#allocation5] sm:$0xff]
    %v57 = vld [vmem:[#allocation5 + $0x8] sm:$0xff]
    %v58 = vld [vmem:[#allocation5 + $0x10] sm:$0xff]
    %v59 = vld [vmem:[#allocation5 + $0x18] sm:$0xff]
    %v60 = vld [vmem:[#allocation7] sm:$0x1]
    %v62 = vlaneseq
    %v63 = vshrl.u32 %v62, 7
    %v64 = vsub.s32 0, %v63
    %v65 = vrot.slane %v60, %v64
    %vm67 = vcmask 261120
    %v69 = vsel %vm67, %v54, 0
    %v72 = vsel %vm67, %v55, 0
    %74 = vmatprep.subr.mxu0 0.0
    %75 = vmatpush1.msra.mxu0 %v56
    %76 = vmatprep.subr.mxu0 0.0
    %77 = vmatpush1.msra.mxu0 %v57
    %78 = vmatprep.subr.mxu0 0.0
    %79 = vmatpush1.msra.mxu0 %v58
    %80 = vmatprep.subr.mxu0 0.0
    %81 = vmatpush1.msra.mxu0 %v59
    %82 = vmatprep.subr.mxu0 0.0
    %83 = vmatpush1.msra.mxu0 0.0
    %84 = vmatprep.subr.mxu0 0.0
    %85 = vmatpush1.msra.mxu0 0.0
    %86 = vmatprep.subr.mxu0 0.0
    %87 = vmatpush1.msra.mxu0 0.0
    %88 = vmatprep.subr.mxu0 0.0
    %89 = vmatpush1.msra.mxu0 0.0
    %90 = vmatprep.subr.mxu0 0.0
    %91 = vmatpush1.msra.mxu0 0.0
    %92 = vmatprep.subr.mxu0 0.0
    %93 = vmatpush1.msra.mxu0 0.0
    %94 = vmatprep.subr.mxu0 0.0
    %95 = vmatpush1.msra.mxu0 0.0
    %96 = vmatprep.subr.mxu0 0.0
    %97 = vmatpush1.msra.mxu0 0.0
    %98 = vmatprep.subr.mxu0 0.0
    %99 = vmatpush1.msra.mxu0 0.0
    %100 = vmatprep.subr.mxu0 0.0
    %101 = vmatpush1.msra.mxu0 0.0
    %102 = vmatprep.subr.mxu0 0.0
    %103 = vmatpush1.msra.mxu0 0.0
    %104 = vmatprep.subr.mxu0 0.0
    %105 = vmatpush1.msra.mxu0 0.0
    %106 = vmatprep.subr.mxu0 0.0
    %107 = vmatpush1.msra.mxu0 0.0
    %108 = vmatprep.subr.mxu0 0.0
    %109 = vmatpush1.msra.mxu0 0.0
    %110 = vmatprep.subr.mxu0 0.0
    %111 = vmatpush1.msra.mxu0 0.0
    %112 = vmatprep.subr.mxu0 0.0
    %113 = vmatpush1.msra.mxu0 0.0
    %114 = vmatprep.subr.mxu0 0.0
    %115 = vmatpush1.msra.mxu0 0.0
    %116 = vmatprep.subr.mxu0 0.0
    %117 = vmatpush1.msra.mxu0 0.0
    %118 = vmatprep.subr.mxu0 0.0
    %119 = vmatpush1.msra.mxu0 0.0
    %120 = vmatprep.subr.mxu0 0.0
    %121 = vmatpush1.msra.mxu0 0.0
    %122 = vmatprep.subr.mxu0 0.0
    %123 = vmatpush1.msra.mxu0 0.0
    %124 = vmatprep.subr.mxu0 0.0
    %125 = vmatpush1.msra.mxu0 0.0
    %126 = vmatprep.subr.mxu0 0.0
    %127 = vmatpush1.msra.mxu0 0.0
    %128 = vmatprep.subr.mxu0 0.0
    %129 = vmatpush1.msra.mxu0 0.0
    %130 = vmatprep.subr.mxu0 0.0
    %131 = vmatpush1.msra.mxu0 0.0
    %132 = vmatprep.subr.mxu0 0.0
    %133 = vmatpush1.msra.mxu0 0.0
    %134 = vmatprep.subr.mxu0 0.0
    %135 = vmatpush1.msra.mxu0 0.0
    %136 = vmatprep.subr.mxu0 0.0
    %137 = vmatpush1.msra.mxu0 0.0
    %138 = vmatprep.mubr.f32.mxu0 0.0
    %139 = vmatmul.mubr.f32.gmra.mrb[0].mxu0 %v69
    %v140 = vpop.f32.mrb[0].mxu0
    %v141 = vadd.f32 %v65, %v140
    %v142 = vpop.f32.mrb[0].mxu0
    %143 = vmatprep.mubr.f32.mxu0 0.0
    %144 = vmatmul.mubr.f32.gmra.mrb[0].mxu0 %v72
    %v145 = vpop.f32.mrb[0].mxu0
    %v146 = vadd.f32 %v65, %v145
    %v147 = vpop.f32.mrb[0].mxu0
    %148 = vdwg.mxu0
    %149 = vst.msk [vmem:[#allocation8] sm:$0xff] %vm67, %v141
    %150 = vst.msk [vmem:[#allocation8 + $0x8] sm:$0xff] %vm67, %v146
    // Predicated region
    $region26: #{tpu_custom_call.1} parent=1 // pred_check
      _
    $region27: #{tpu_custom_call.1} parent=1 // pred_check_branch
      %152 = sbr.rel (0) target = $region29
    $region28: #{tpu_custom_call.1} parent=1 // pred_region
      %s154 = ssub.s32 256, 256
      %155 = vsyncadd [#allocation4], %s154
      %s156 = sshll.u32 [#allocation8], 4
      %s157 = int_to_ptr.vmem [resolvable:$true] %s156
      %162 = dma.vmem_to_hbm [thread:$0]  %s157, 256, %s3, [#allocation4], 128, 128, 8
    $region29: #{tpu_custom_call.1} parent=1 // pred_fallthru
      _
    // Predicated region
    $region30: #{tpu_custom_call.1} parent=1 // pred_check
      _
    $region31: #{tpu_custom_call.1} parent=1 // pred_check_branch
      %164 = sbr.rel (0) target = $region33
    $region32: #{tpu_custom_call.1} parent=1 // pred_region
      %165 = dma.done [#allocation4], 256
    $region33: #{tpu_custom_call.1} parent=1 // pred_fallthru
      _
    %166 = vsyncpa [#allocation3], 1
    %167 = vsyncpa [#allocation6], 1
    %168 = vsyncpa [#allocation4], 1

</llo_original>
